<compile_context>
chip_gen: v7x
topology: tpu7x:2x2x1
jax: 0.10.0
libtpu: 0.0.40
codegen_flags: <defaults>
</compile_context>

<pallas_src>
import jax
import jax.numpy as jnp
from jax.experimental import pallas as pl
from jax.experimental.pallas import tpu as pltpu


def mlp_kernel(x_ref, w1_ref, b1_ref, w2_ref, b2_ref, o_ref):
    # x_ref: (3, TB)   w1_ref: (10, 3)   b1_ref: (10, 1)
    # w2_ref: (10, 1)  b2_ref: (1, 1) in SMEM     o_ref: (1, TB)
    # Layer 1 on the MXU: (10,3) @ (3,TB) -> (10,TB), f32 accumulate.
    h = jnp.dot(w1_ref[...], x_ref[...], preferred_element_type=jnp.float32)
    h = jnp.maximum(h + b1_ref[...], 0.0)                    # bias bcast over lanes
    # Layer 2 on VPU (broadcast-mul) + XLU (sublane reduce): avoids an N=1 MXU pass.
    z = jnp.sum(h * w2_ref[...], axis=0, keepdims=True)      # (1, TB)
    z = z + b2_ref[0, 0]                                     # SMEM scalar bias
    o_ref[...] = jax.nn.sigmoid(z).astype(o_ref.dtype)


def neural_network_forward(x, w1, b1, w2, b2, *, tb=512):
    """Forward pass of the 3->10->1 MLP.

    x:  (B, 3)  f32
    w1: (10, 3) f32   b1: (10,) f32     (PyTorch nn.Linear(3, 10) layout)
    w2: (1, 10) f32   b2: (1,)  f32     (PyTorch nn.Linear(10, 1) layout)
    returns (B, 1) f32 = sigmoid(relu(x @ w1.T + b1) @ w2.T + b2)
    """
    B = x.shape[0]
    n_tiles = pl.cdiv(B, tb)
    B_pad = n_tiles * tb                          # lane-dense multiple of the tile

    # Host-side layout plumbing (tiny / free): put the batch on the lane axis.
    x_t = jnp.pad(x.T.astype(jnp.float32), ((0, 0), (0, B_pad - B)))   # (3, B_pad)
    b1_c = b1.reshape(10, 1).astype(jnp.float32)                       # (10, 1)
    w2_c = w2.reshape(1, 10).T.astype(jnp.float32)                     # (10, 1)
    b2_c = b2.reshape(1, 1).astype(jnp.float32)                        # SMEM scalar

    out_t = pl.pallas_call(
        mlp_kernel,
        out_shape=jax.ShapeDtypeStruct((1, B_pad), jnp.float32),
        grid_spec=pltpu.PrefetchScalarGridSpec(
            num_scalar_prefetch=0,
            grid=(n_tiles,),
            in_specs=[
                pl.BlockSpec((3, tb), lambda i: (0, i)),       # batch-tiled input
                pl.BlockSpec((10, 3), lambda i: (0, 0)),       # VMEM-resident weights
                pl.BlockSpec((10, 1), lambda i: (0, 0)),
                pl.BlockSpec((10, 1), lambda i: (0, 0)),
                pl.BlockSpec((1, 1), lambda i: (0, 0),
                             memory_space=pltpu.MemorySpace.SMEM),
            ],
            out_specs=pl.BlockSpec((1, tb), lambda i: (0, i)),  # lane-dense store
        ),
        compiler_params=pltpu.CompilerParams(
            dimension_semantics=("parallel",)),   # megacore / v7x dual-TC sharding
    )(x_t, w1.astype(jnp.float32), b1_c, w2_c, b2_c)

    return out_t[:, :B].T                         # (B, 1)


def init_params(key):
    """nn.Linear-style init: U(-1/sqrt(fan_in), +1/sqrt(fan_in)), PyTorch layouts."""
    k1, k2, k3, k4 = jax.random.split(key, 4)
    lim1 = 1.0 / jnp.sqrt(3.0)    # hidden: fan_in = 3
    lim2 = 1.0 / jnp.sqrt(10.0)   # output: fan_in = 10
    w1 = jax.random.uniform(k1, (10, 3), jnp.float32, -lim1, lim1)
    b1 = jax.random.uniform(k2, (10,), jnp.float32, -lim1, lim1)
    w2 = jax.random.uniform(k3, (1, 10), jnp.float32, -lim2, lim2)
    b2 = jax.random.uniform(k4, (1,), jnp.float32, -lim2, lim2)
    return w1, b1, w2, b2


if __name__ == "__main__":
    key = jax.random.PRNGKey(0)
    kx, kp = jax.random.split(key)

    B = 300                                   # not a tile multiple: exercises padding
    x = jax.random.normal(kx, (B, 3), jnp.float32)
    w1, b1, w2, b2 = init_params(kp)

    out = neural_network_forward(x, w1, b1, w2, b2, tb=128)   # grid = (3,)
    out = jax.block_until_ready(out)

    # Plain-JAX reference (same math as the PyTorch module).
    ref = jax.nn.sigmoid(jnp.maximum(x @ w1.T + b1, 0.0) @ w2.T + b2)
    assert out.shape == (B, 1)
    assert jnp.allclose(out, ref, atol=1e-5), "mismatch vs reference"

    print("KERNEL_OK")
</pallas_src>

<mosaic_0001>
module attributes {stable_mosaic.version = 11 : i64} {
  func.func @mlp_kernel(%arg0: i32, %arg1: memref<3x128xf32, #tpu.memory_space<vmem>>, %arg2: memref<10x3xf32, #tpu.memory_space<vmem>>, %arg3: memref<10x1xf32, #tpu.memory_space<vmem>>, %arg4: memref<10x1xf32, #tpu.memory_space<vmem>>, %arg5: memref<1x1xf32, #tpu.memory_space<smem>>, %arg6: memref<1x128xf32, #tpu.memory_space<vmem>>) attributes {dimension_semantics = [#tpu.dimension_semantics<parallel>], iteration_bounds = array<i64: 3>, scalar_prefetch = 0 : i64, scratch_operands = 0 : i64, tpu.core_type = #tpu.core_type<tc>, window_params = [{transform_indices = @transform_0, window_bounds = array<i64: 3, 128>}, {pipeline_mode = #tpu.pipeline_mode<synchronous>, transform_indices = @transform_1, window_bounds = array<i64: 10, 3>}, {pipeline_mode = #tpu.pipeline_mode<synchronous>, transform_indices = @transform_2, window_bounds = array<i64: 10, 1>}, {pipeline_mode = #tpu.pipeline_mode<synchronous>, transform_indices = @transform_3, window_bounds = array<i64: 10, 1>}, {transform_indices = @transform_4, window_bounds = array<i64: 1, 1>}, {transform_indices = @transform_5, window_bounds = array<i64: 1, 128>}]} {
    %c0 = arith.constant 0 : index
    %c0_0 = arith.constant 0 : index
    %0 = vector.load %arg2[%c0, %c0_0] : memref<10x3xf32, #tpu.memory_space<vmem>>, vector<10x3xf32>
    %c0_1 = arith.constant 0 : index
    %c0_2 = arith.constant 0 : index
    %1 = vector.load %arg1[%c0_1, %c0_2] : memref<3x128xf32, #tpu.memory_space<vmem>>, vector<3x128xf32>
    %cst = arith.constant dense<0.000000e+00> : vector<10x128xf32>
    %2 = tpu.matmul %0, %1, %cst {dimension_numbers = #tpu.dot_dimension_numbers<[1], [0], [0], [1], [0, 0, 1, 1], [], []>} : vector<10x3xf32>, vector<3x128xf32>, vector<10x128xf32> -> vector<10x128xf32>
    %c0_3 = arith.constant 0 : index
    %c0_4 = arith.constant 0 : index
    %3 = vector.load %arg3[%c0_3, %c0_4] : memref<10x1xf32, #tpu.memory_space<vmem>>, vector<10x1xf32>
    %4 = vector.broadcast %3 : vector<10x1xf32> to vector<10x128xf32>
    %5 = arith.addf %2, %4 : vector<10x128xf32>
    %cst_5 = arith.constant 0.000000e+00 : f32
    %6 = vector.broadcast %cst_5 : f32 to vector<10x128xf32>
    %7 = arith.maximumf %5, %6 : vector<10x128xf32>
    %c0_6 = arith.constant 0 : index
    %c0_7 = arith.constant 0 : index
    %8 = vector.load %arg4[%c0_6, %c0_7] : memref<10x1xf32, #tpu.memory_space<vmem>>, vector<10x1xf32>
    %9 = vector.broadcast %8 : vector<10x1xf32> to vector<10x128xf32>
    %10 = arith.mulf %7, %9 : vector<10x128xf32>
    %cst_8 = arith.constant dense<0.000000e+00> : vector<128xf32>
    %11 = vector.multi_reduction <add>, %10, %cst_8 [0] : vector<10x128xf32> to vector<128xf32>
    %12 = vector.shape_cast %11 : vector<128xf32> to vector<1x128xf32>
    %c0_9 = arith.constant 0 : index
    %c0_10 = arith.constant 0 : index
    %13 = memref.load %arg5[%c0_9, %c0_10] : memref<1x1xf32, #tpu.memory_space<smem>>
    %14 = vector.broadcast %13 : f32 to vector<1x128xf32>
    %15 = arith.addf %12, %14 : vector<1x128xf32>
    %16 = arith.negf %15 : vector<1x128xf32>
    %17 = math.exp %16 : vector<1x128xf32>
    %cst_11 = arith.constant 1.000000e+00 : f32
    %18 = vector.broadcast %cst_11 : f32 to vector<1x128xf32>
    %19 = arith.addf %18, %17 : vector<1x128xf32>
    %20 = arith.divf %18, %19 : vector<1x128xf32>
    %c0_12 = arith.constant 0 : index
    %c0_13 = arith.constant 0 : index
    %21 = vector.load %arg6[%c0_12, %c0_13] : memref<1x128xf32, #tpu.memory_space<vmem>>, vector<1x128xf32>
    tpu.vector_store %arg6[%c0_12, %c0_13], %20 {strides = array<i32>} : memref<1x128xf32, #tpu.memory_space<vmem>>, vector<1x128xf32>,
    return
  }
  func.func @transform_0(%arg0: i32) -> (i32, i32) {
    %c0_i32 = arith.constant 0 : i32
    %c0_i32_0 = arith.constant 0 : i32
    return %c0_i32, %arg0 : i32, i32
  }
  func.func @transform_1(%arg0: i32) -> (i32, i32) {
    %c0_i32 = arith.constant 0 : i32
    %c0_i32_0 = arith.constant 0 : i32
    %c0_i32_1 = arith.constant 0 : i32
    return %c0_i32, %c0_i32_0 : i32, i32
  }
  func.func @transform_2(%arg0: i32) -> (i32, i32) {
    %c0_i32 = arith.constant 0 : i32
    %c0_i32_0 = arith.constant 0 : i32
    %c0_i32_1 = arith.constant 0 : i32
    return %c0_i32, %c0_i32_0 : i32, i32
  }
  func.func @transform_3(%arg0: i32) -> (i32, i32) {
    %c0_i32 = arith.constant 0 : i32
    %c0_i32_0 = arith.constant 0 : i32
    %c0_i32_1 = arith.constant 0 : i32
    return %c0_i32, %c0_i32_0 : i32, i32
  }
  func.func @transform_4(%arg0: i32) -> (i32, i32) {
    %c0_i32 = arith.constant 0 : i32
    %c0_i32_0 = arith.constant 0 : i32
    %c0_i32_1 = arith.constant 0 : i32
    return %c0_i32, %c0_i32_0 : i32, i32
  }
  func.func @transform_5(%arg0: i32) -> (i32, i32) {
    %c0_i32 = arith.constant 0 : i32
    %c0_i32_0 = arith.constant 0 : i32
    return %c0_i32, %arg0 : i32, i32
  }
}

</mosaic_0001>

<llo_original>
// kernel: tpu_custom_call.1
$region0: #{tpu_custom_call.1}
  #allocation0 [shape = 'u32[]', space=smem, size = 0x4, offset = 0x4, fixed_abs, tag = 'smem constant byte address 0x4 - core index']
  #allocation1 [shape = 'u32[144,128]{1,0:T(1,128)}', space=vmem, size = 0x12000, scoped, tag = 'internal scratch']
  #allocation2 [shape = 'f32[1,1]{1,0:T(1,128)S(6)}', space=smem, size = 0x200, scoped, tag = 'scoped memory for tpu_custom_call.1']
  %s0 = inlined_call_operand.vmem [shape: f32[3,384], index: 0, kind: input, shape index: {}]
  %s1 = inlined_call_operand.vmem [shape: f32[10,3], index: 1, kind: input, shape index: {}]
  %s2 = inlined_call_operand.vmem [shape: f32[10,1], index: 2, kind: input, shape index: {}]
  %s3 = inlined_call_operand.vmem [shape: f32[10,1], index: 3, kind: input, shape index: {}]
  %s4 = inlined_call_operand.<no memory space> [shape: f32[1,1], index: 4, kind: input, shape index: {}]
  %s5 = inlined_call_operand.hbm [shape: f32[1,384], index: 5, kind: output, shape index: {}]
  %s6 = sld [smem:[#allocation0]]
  $region53: #{tpu_custom_call.1} parent=0
    _
  %s8 = ssub.s32 1, %s6
  %s9 = scalar_select 0, %s8, %s6
  %10 = sst [smem:[#allocation2]] %s4
  $region1: #{tpu_custom_call.1} parent=0
    #allocation3 [shape = 'u8[1024]{0}', space=vmem, size = 0x400, scoped, tag = 'output window, operand 0']
    #allocation4 [shape = 's32[2]{0}', space=sflag, size = 0x8, scoped, tag = 'scoped memory for tpu_custom_call.1']
    %11 = vsyncpa [#allocation4], 0
    %s12 = scalar_lea.sflag [#allocation4], 1
    %13 = vsyncpa %s12, 0
    loop: start=0, step=1, limit=5
    $region2: #{tpu_custom_call.1} parent=1 // loop_pre_header
      _
    $region3: #{tpu_custom_call.1} parent=1 // loop_header
      %s15 = sphi 0, %s19
      %p16 = scmp.ge.s32.totalorder %s15, 5
      %s25 = sphi 0, %s27
      %s28 = sphi 0, %s25
      %s29 = sphi 0, %s28
      %s45 = sphi 0, %s29
      %s49 = sphi 0, %s49
      %s51 = sphi 0, %s49
      %s52 = sphi 0, %s51
      %s66 = sphi 0, %s52
      %s70 = sphi 0, %s70
      %s72 = sphi 0, %s70
      %s73 = sphi 0, %s72
      %s87 = sphi 0, %s73
      %s91 = sphi 0, %s91
      %s93 = sphi 0, %s91
      %s94 = sphi 0, %s93
      %s108 = sphi 0, %s94
      %s112 = sphi 0, %s112
      %s114 = sphi 0, %s112
      %s115 = sphi 0, %s114
      %s129 = sphi 0, %s115
      %s135 = sphi 0, %s137
      %s138 = sphi 0, %s135
      %s139 = sphi 0, %s138
      %s155 = sphi 0, %s139
    $region4: #{tpu_custom_call.1} parent=1 // loop_header_branch
      %18 = sbr.rel (%p16) target = $region8
    $region5: #{tpu_custom_call.1} parent=1 // loop_body
      %s20 = ssub.s32 %s15, 1
      %s21 = ssub.s32 %s15, 2
      %s22 = sadd.s32 %s15, 1
      %s23 = ssub.s32 %s15, %s22
      %p24 = scmp.eq.s32.totalorder %s23, 0
      %s26 = sadd.s32 %s25, 1
      %s27 = scalar_select %p24, %s25, %s26
      %p30 = pneg %p24
      %p31 = scmp.eq.s32.totalorder %s15, 2
      %p32 = por %p30, %p31
      %p33 = scmp.ne.s32.totalorder %s25, %s28
      %p34 = scmp.eq.s32.totalorder %s15, 0
      %p35 = por %p33, %p34
      %p36 = scmp.ne.s32.totalorder %s25, %s28
      %p37 = scmp.eq.s32.totalorder %s20, 2
      %p38 = por %p36, %p37
      %p39 = scmp.ne.s32.totalorder %s28, %s29
      %p40 = scmp.eq.s32.totalorder %s20, 0
      %p41 = por %p39, %p40
      %p42 = scmp.ne.s32.totalorder %s28, %s29
      %p43 = scmp.eq.s32.totalorder %s21, 2
      %p44 = por %p42, %p43
      %p46 = scmp.ne.s32.totalorder %s29, %s45
      %p47 = scmp.eq.s32.totalorder %s21, 0
      %p48 = por %p46, %p47
      %s50 = sadd.s32 %s49, 1
      %p53 = scmp.eq.s32.totalorder %s15, 2
      %p54 = scmp.ne.s32.totalorder %s49, %s51
      %p55 = scmp.eq.s32.totalorder %s15, 0
      %p56 = por %p54, %p55
      %p57 = scmp.ne.s32.totalorder %s49, %s51
      %p58 = scmp.eq.s32.totalorder %s20, 2
      %p59 = por %p57, %p58
      %p60 = scmp.ne.s32.totalorder %s51, %s52
      %p61 = scmp.eq.s32.totalorder %s20, 0
      %p62 = por %p60, %p61
      %p63 = scmp.ne.s32.totalorder %s51, %s52
      %p64 = scmp.eq.s32.totalorder %s21, 2
      %p65 = por %p63, %p64
      %p67 = scmp.ne.s32.totalorder %s52, %s66
      %p68 = scmp.eq.s32.totalorder %s21, 0
      %p69 = por %p67, %p68
      %s71 = sadd.s32 %s70, 1
      %p74 = scmp.eq.s32.totalorder %s15, 2
      %p75 = scmp.ne.s32.totalorder %s70, %s72
      %p76 = scmp.eq.s32.totalorder %s15, 0
      %p77 = por %p75, %p76
      %p78 = scmp.ne.s32.totalorder %s70, %s72
      %p79 = scmp.eq.s32.totalorder %s20, 2
      %p80 = por %p78, %p79
      %p81 = scmp.ne.s32.totalorder %s72, %s73
      %p82 = scmp.eq.s32.totalorder %s20, 0
      %p83 = por %p81, %p82
      %p84 = scmp.ne.s32.totalorder %s72, %s73
      %p85 = scmp.eq.s32.totalorder %s21, 2
      %p86 = por %p84, %p85
      %p88 = scmp.ne.s32.totalorder %s73, %s87
      %p89 = scmp.eq.s32.totalorder %s21, 0
      %p90 = por %p88, %p89
      %s92 = sadd.s32 %s91, 1
      %p95 = scmp.eq.s32.totalorder %s15, 2
      %p96 = scmp.ne.s32.totalorder %s91, %s93
      %p97 = scmp.eq.s32.totalorder %s15, 0
      %p98 = por %p96, %p97
      %p99 = scmp.ne.s32.totalorder %s91, %s93
      %p100 = scmp.eq.s32.totalorder %s20, 2
      %p101 = por %p99, %p100
      %p102 = scmp.ne.s32.totalorder %s93, %s94
      %p103 = scmp.eq.s32.totalorder %s20, 0
      %p104 = por %p102, %p103
      %p105 = scmp.ne.s32.totalorder %s93, %s94
      %p106 = scmp.eq.s32.totalorder %s21, 2
      %p107 = por %p105, %p106
      %p109 = scmp.ne.s32.totalorder %s94, %s108
      %p110 = scmp.eq.s32.totalorder %s21, 0
      %p111 = por %p109, %p110
      %s113 = sadd.s32 %s112, 1
      %p116 = scmp.eq.s32.totalorder %s15, 2
      %p117 = scmp.ne.s32.totalorder %s112, %s114
      %p118 = scmp.eq.s32.totalorder %s15, 0
      %p119 = por %p117, %p118
      %p120 = scmp.ne.s32.totalorder %s112, %s114
      %p121 = scmp.eq.s32.totalorder %s20, 2
      %p122 = por %p120, %p121
      %p123 = scmp.ne.s32.totalorder %s114, %s115
      %p124 = scmp.eq.s32.totalorder %s20, 0
      %p125 = por %p123, %p124
      %p126 = scmp.ne.s32.totalorder %s114, %s115
      %p127 = scmp.eq.s32.totalorder %s21, 2
      %p128 = por %p126, %p127
      %p130 = scmp.ne.s32.totalorder %s115, %s129
      %p131 = scmp.eq.s32.totalorder %s21, 0
      %p132 = por %p130, %p131
      %s133 = ssub.s32 %s15, %s22
      %p134 = scmp.eq.s32.totalorder %s133, 0
      %s136 = sadd.s32 %s135, 1
      %s137 = scalar_select %p134, %s135, %s136
      %p140 = pneg %p134
      %p141 = scmp.eq.s32.totalorder %s15, 2
      %p142 = por %p140, %p141
      %p143 = scmp.ne.s32.totalorder %s135, %s138
      %p144 = scmp.eq.s32.totalorder %s15, 0
      %p145 = por %p143, %p144
      %p146 = scmp.ne.s32.totalorder %s135, %s138
      %p147 = scmp.eq.s32.totalorder %s20, 2
      %p148 = por %p146, %p147
      %p149 = scmp.ne.s32.totalorder %s138, %s139
      %p150 = scmp.eq.s32.totalorder %s20, 0
      %p151 = por %p149, %p150
      %p152 = scmp.ne.s32.totalorder %s138, %s139
      %p153 = scmp.eq.s32.totalorder %s21, 2
      %p154 = por %p152, %p153
      %p156 = scmp.ne.s32.totalorder %s139, %s155
      %p157 = scmp.eq.s32.totalorder %s21, 0
      %p158 = por %p156, %p157
      %p159 = scmp.le.s32.totalorder 1, %s15
      %p160 = scmp.lt.s32.totalorder %s15, 4
      %p161 = pnand %p159, %p160
      %p162 = pneg %p161
      // Predicated region
      $region9: #{tpu_custom_call.1} parent=5 // pred_check
        _
      $region10: #{tpu_custom_call.1} parent=5 // pred_check_branch
        %164 = sbr.rel (%p161) target = $region12
      $region11: #{tpu_custom_call.1} parent=5 // pred_region
        %s165 = ssub.s32 %s15, 1
        // Predicated region
        $region13: #{tpu_custom_call.1} parent=11 // pred_check
          %p166 = pneg %p62
        $region14: #{tpu_custom_call.1} parent=11 // pred_check_branch
          %168 = sbr.rel (%p166) target = $region16
        $region15: #{tpu_custom_call.1} parent=11 // pred_region
          _
        $region16: #{tpu_custom_call.1} parent=11 // pred_fallthru
          _
        // Predicated region
        $region17: #{tpu_custom_call.1} parent=11 // pred_check
          %p169 = pneg %p83
        $region18: #{tpu_custom_call.1} parent=11 // pred_check_branch
          %171 = sbr.rel (%p169) target = $region20
        $region19: #{tpu_custom_call.1} parent=11 // pred_region
          _
        $region20: #{tpu_custom_call.1} parent=11 // pred_fallthru
          _
        // Predicated region
        $region21: #{tpu_custom_call.1} parent=11 // pred_check
          %p172 = pneg %p104
        $region22: #{tpu_custom_call.1} parent=11 // pred_check_branch
          %174 = sbr.rel (%p172) target = $region24
        $region23: #{tpu_custom_call.1} parent=11 // pred_region
          _
        $region24: #{tpu_custom_call.1} parent=11 // pred_fallthru
          _
        // Predicated region
        $region25: #{tpu_custom_call.1} parent=11 // pred_check
          %p175 = pneg %p125
        $region26: #{tpu_custom_call.1} parent=11 // pred_check_branch
          %177 = sbr.rel (%p175) target = $region28
        $region27: #{tpu_custom_call.1} parent=11 // pred_region
          _
        $region28: #{tpu_custom_call.1} parent=11 // pred_fallthru
          _
      $region12: #{tpu_custom_call.1} parent=5 // pred_fallthru
        _
      %p178 = scmp.lt.s32.totalorder %s15, 3
      // Predicated region
      $region29: #{tpu_custom_call.1} parent=5 // pred_check
        %p179 = pneg %p178
      $region30: #{tpu_custom_call.1} parent=5 // pred_check_branch
        %181 = sbr.rel (%p179) target = $region32
      $region31: #{tpu_custom_call.1} parent=5 // pred_region
        // Predicated region
        $region33: #{tpu_custom_call.1} parent=31 // pred_check
          %p182 = pneg %p35
        $region34: #{tpu_custom_call.1} parent=31 // pred_check_branch
          %184 = sbr.rel (%p182) target = $region36
        $region35: #{tpu_custom_call.1} parent=31 // pred_region
          %p185 = scmp.lt.s32.totalorder %s15, 2
          %s186 = scalar_select %p185, %s15, 2
          %s187 = smul.addr %s186, 4
          %s188 = scalar_lea.vmem %s0, %s187
        $region36: #{tpu_custom_call.1} parent=31 // pred_fallthru
          _
      $region32: #{tpu_custom_call.1} parent=5 // pred_fallthru
        _
      %p189 = scmp.le.s32.totalorder 1, %s15
      %p190 = scmp.lt.s32.totalorder %s15, 4
      %p191 = pnand %p189, %p190
      %p192 = pneg %p191
      // Predicated region
      $region37: #{tpu_custom_call.1} parent=5 // pred_check
        _
      $region38: #{tpu_custom_call.1} parent=5 // pred_check_branch
        %194 = sbr.rel (%p191) target = $region40
      $region39: #{tpu_custom_call.1} parent=5 // pred_region
        %s195 = ssub.s32 %s15, 1
        %p196 = scmp.lt.s32.totalorder %s20, 2
        %s197 = scalar_select %p196, %s20, 2
        %s198 = smul.addr %s197, 4
        %s199 = scalar_lea.vmem %s0, %s198
        %p200 = pneg %p41
        %p201 = pneg %p38
        %p202 = pneg %p62
        %p203 = pneg %p59
        %p204 = pneg %p83
        %p205 = pneg %p80
        %p206 = pneg %p104
        %p207 = pneg %p101
        %p208 = pneg %p125
        %p209 = pneg %p122
        %p210 = pneg %p151
        %p211 = pneg %p148
        %s212 = sand.u32 %s138, 1
        %s213 = scalar_lea.sflag [#allocation4], %s212
        %s214 = sand.u32 %s138, 1
        %s215 = scalar_lea.vmem [#allocation3], %s214
        %p216 = scmp.lt.s32.totalorder %s20, 2
        %s217 = scalar_select %p216, %s20, 2
        %s218 = smul.addr %s217, 4
        %s219 = scalar_lea.vmem %s0, %s218
        %v220 = vld [vmem:[%s1] sm:$0xff]
        %v221 = vld [vmem:[%s1 + $0x8] sm:$0x3]
        %v222 = vld [vmem:[%s219] sm:$0x7]
        %v223 = vld [vmem:[%s2] sm:$0xff]
        %v224 = vld [vmem:[%s2 + $0x8] sm:$0x3]
        %226 = vset.pattern.permute.xlu0 0
        %227 = vperm.xlu0 %226, %v223
        %v228 = vpop.permute.xlu0 %227
        %231 = vset.pattern.permute.xlu0 0
        %232 = vperm.xlu0 %231, %v224
        %v233 = vpop.permute.xlu0 %232
        %vm235 = vcmask 23552
        %v237 = vsel %vm235, %v220, 0
        %v240 = vsel %vm235, %v221, 0
        %vm242 = vcmask 1042432
        %v244 = vsel %vm242, %v222, 0
        %246 = vmatprep.subr.mxu0 0.0
        %247 = vmatpush1.msra.mxu0 %v244
        %248 = vmatprep.subr.mxu0 0.0
        %249 = vmatpush1.msra.mxu0 0.0
        %250 = vmatprep.subr.mxu0 0.0
        %251 = vmatpush1.msra.mxu0 0.0
        %252 = vmatprep.subr.mxu0 0.0
        %253 = vmatpush1.msra.mxu0 0.0
        %254 = vmatprep.subr.mxu0 0.0
        %255 = vmatpush1.msra.mxu0 0.0
        %256 = vmatprep.subr.mxu0 0.0
        %257 = vmatpush1.msra.mxu0 0.0
        %258 = vmatprep.subr.mxu0 0.0
        %259 = vmatpush1.msra.mxu0 0.0
        %260 = vmatprep.subr.mxu0 0.0
        %261 = vmatpush1.msra.mxu0 0.0
        %262 = vmatprep.subr.mxu0 0.0
        %263 = vmatpush1.msra.mxu0 0.0
        %264 = vmatprep.subr.mxu0 0.0
        %265 = vmatpush1.msra.mxu0 0.0
        %266 = vmatprep.subr.mxu0 0.0
        %267 = vmatpush1.msra.mxu0 0.0
        %268 = vmatprep.subr.mxu0 0.0
        %269 = vmatpush1.msra.mxu0 0.0
        %270 = vmatprep.subr.mxu0 0.0
        %271 = vmatpush1.msra.mxu0 0.0
        %272 = vmatprep.subr.mxu0 0.0
        %273 = vmatpush1.msra.mxu0 0.0
        %274 = vmatprep.subr.mxu0 0.0
        %275 = vmatpush1.msra.mxu0 0.0
        %276 = vmatprep.subr.mxu0 0.0
        %277 = vmatpush1.msra.mxu0 0.0
        %278 = vmatprep.subr.mxu0 0.0
        %279 = vmatpush1.msra.mxu0 0.0
        %280 = vmatprep.subr.mxu0 0.0
        %281 = vmatpush1.msra.mxu0 0.0
        %282 = vmatprep.subr.mxu0 0.0
        %283 = vmatpush1.msra.mxu0 0.0
        %284 = vmatprep.subr.mxu0 0.0
        %285 = vmatpush1.msra.mxu0 0.0
        %286 = vmatprep.subr.mxu0 0.0
        %287 = vmatpush1.msra.mxu0 0.0
        %288 = vmatprep.subr.mxu0 0.0
        %289 = vmatpush1.msra.mxu0 0.0
        %290 = vmatprep.subr.mxu0 0.0
        %291 = vmatpush1.msra.mxu0 0.0
        %292 = vmatprep.subr.mxu0 0.0
        %293 = vmatpush1.msra.mxu0 0.0
        %294 = vmatprep.subr.mxu0 0.0
        %295 = vmatpush1.msra.mxu0 0.0
        %296 = vmatprep.subr.mxu0 0.0
        %297 = vmatpush1.msra.mxu0 0.0
        %298 = vmatprep.subr.mxu0 0.0
        %299 = vmatpush1.msra.mxu0 0.0
        %300 = vmatprep.subr.mxu0 0.0
        %301 = vmatpush1.msra.mxu0 0.0
        %302 = vmatprep.subr.mxu0 0.0
        %303 = vmatpush1.msra.mxu0 0.0
        %304 = vmatprep.subr.mxu0 0.0
        %305 = vmatpush1.msra.mxu0 0.0
        %306 = vmatprep.subr.mxu0 0.0
        %307 = vmatpush1.msra.mxu0 0.0
        %308 = vmatprep.subr.mxu0 0.0
        %309 = vmatpush1.msra.mxu0 0.0
        %310 = vmatprep.mubr.f32.mxu0 0.0
        %311 = vmatmul.mubr.f32.gmra.mrb[0].mxu0 %v237
        %v312 = vpop.f32.mrb[0].mxu0
        %v313 = vadd.f32 %v228, %v312
        %v314 = vpop.f32.mrb[0].mxu0
        %315 = vmatprep.mubr.f32.mxu0 0.0
        %316 = vmatmul.mubr.f32.gmra.mrb[0].mxu0 %v240
        %v317 = vpop.f32.mrb[0].mxu0
        %v318 = vadd.f32 %v233, %v317
        %v319 = vpop.f32.mrb[0].mxu0
        %320 = vdwg.mxu0
        %v321 = vmax.f32 %v313, 0.0
        %v322 = vmax.f32 %v318, 0.0
        %v323 = vld [vmem:[%s3] sm:$0xff]
        %v324 = vld [vmem:[%s3 + $0x8] sm:$0x3]
        %326 = vset.pattern.permute.xlu0 0
        %327 = vperm.xlu0 %326, %v323
        %v328 = vpop.permute.xlu0 %327
        %331 = vset.pattern.permute.xlu0 0
        %332 = vperm.xlu0 %331, %v324
        %v333 = vpop.permute.xlu0 %332
        %v335 = vmul.f32 %v321, %v328
        %v336 = vmul.f32 %v322, %v333
        %vm337 = vcmask 1041408
        %v338 = vsel %vm337, %v336, 0.0
        %v339 = vadd.f32 %v335, %v338
        %v340 = vrot.slane %v339, 4
        %v341 = vadd.f32 %v339, %v340
        %v342 = vrot.slane %v341, 2
        %v343 = vadd.f32 %v341, %v342
        %v344 = vrot.slane %v343, 1
        %v345 = vadd.f32 %v343, %v344
        %s346 = sld [smem:[#allocation2]]
        %v347 = vstv %s346
        %v348 = vadd.f32 %v345, %v347
        %v349 = vxor.u32 %v348, 2147483648
        %v350 = vmul.f32 %v349, 1.442695
        %v351 = vpow.pop %v350
        %v352 = vadd.f32 %v351, 1.0
        %v353 = vrcp.pop %v352
        %v354 = vmul.f32 1.0, %v353
        %355 = vst [vmem:[%s215] sm:$0x1] %v354
        %s356 = sand.u32 %s138, 1
        %s357 = scalar_lea.sflag [#allocation4], %s356
        %s358 = sand.u32 %s138, 1
        %s359 = scalar_lea.vmem [#allocation3], %s358
        // Predicated region
        $region41: #{tpu_custom_call.1} parent=39 // pred_check
          %p360 = pneg %p148
        $region42: #{tpu_custom_call.1} parent=39 // pred_check_branch
          %362 = sbr.rel (%p360) target = $region44
        $region43: #{tpu_custom_call.1} parent=39 // pred_region
          %s364 = ssub.s32 16, 16
          %365 = vsyncadd %s357, %s364
          %s366 = smul.addr %s20, 16
          %s367 = scalar_lea.hbm %s5, %s366
          %s369 = sshll.u32 %s359, 4
          %s370 = int_to_ptr.vmem [resolvable:$true] %s369
          %372 = dma.vmem_to_hbm [thread:$0]  %s370, 16, %s367, %s357
        $region44: #{tpu_custom_call.1} parent=39 // pred_fallthru
          _
      $region40: #{tpu_custom_call.1} parent=5 // pred_fallthru
        _
      %p373 = scmp.le.s32.totalorder 2, %s15
      // Predicated region
      $region45: #{tpu_custom_call.1} parent=5 // pred_check
        %p374 = pneg %p373
      $region46: #{tpu_custom_call.1} parent=5 // pred_check_branch
        %376 = sbr.rel (%p374) target = $region48
      $region47: #{tpu_custom_call.1} parent=5 // pred_region
        %s377 = ssub.s32 %s15, 2
        // Predicated region
        $region49: #{tpu_custom_call.1} parent=47 // pred_check
          %p378 = pneg %p154
        $region50: #{tpu_custom_call.1} parent=47 // pred_check_branch
          %380 = sbr.rel (%p378) target = $region52
        $region51: #{tpu_custom_call.1} parent=47 // pred_region
          %s381 = sand.u32 %s139, 1
          %s382 = scalar_lea.sflag [#allocation4], %s381
          %s383 = sand.u32 %s139, 1
          %s384 = scalar_lea.vmem [#allocation3], %s383
          %385 = dma.done %s382, 16
        $region52: #{tpu_custom_call.1} parent=47 // pred_fallthru
          _
      $region48: #{tpu_custom_call.1} parent=5 // pred_fallthru
        _
    $region6: #{tpu_custom_call.1} parent=1 // loop_footer
      %s19 = sadd.s32 1, %s15
    $region7: #{tpu_custom_call.1} parent=1 // loop_footer_branch
      %14 = sbr.rel target = $region3
    $region8: #{tpu_custom_call.1} parent=1 // loop_exit
      _
    %386 = vsyncpa [#allocation4], 1
    %s387 = scalar_lea.sflag [#allocation4], 1
    %388 = vsyncpa %s387, 1

</llo_original>
